<compile_context>
chip_gen: v5e
topology: v5e:2x2
jax: 0.10.0
libtpu: 0.0.40
codegen_flags: <defaults>
</compile_context>

<pallas_src>
import functools

import jax
import jax.numpy as jnp
from jax.experimental import pallas as pl
from jax.experimental.pallas import tpu as pltpu


def _conv_bn_lrelu_kernel(*refs, taps, cin, hw, t_len, t_pad,
                          relu, neg_slope, has_bias):
    """Fused conv + (folded) BN bias + leaky-relu for one batch block.

    refs (in order):
      x_ref:    (NB, Cin, H*W)       flattened NCHW image block (input dtype)
      w_ref:    (Cout, Q=KH*KW*Cin)  bf16 weights, BN scale already folded in
      b_ref:    (Cout, 1)            optional folded BN bias, f32   [if has_bias]
      o_ref:    (NB, Cout, Tp)       flattened, lane-padded output block
      cols_ref: (Q, NB*Tp)           bf16 im2col scratch (single matmul RHS)
    """
    if has_bias:
        x_ref, w_ref, b_ref, o_ref, cols_ref = refs
    else:
        x_ref, w_ref, o_ref, cols_ref = refs
        b_ref = None

    nb = o_ref.shape[0]

    # Zero-fill once per step: every column the tap stores below do not cover
    # (row-wrap tails of the last-row taps + the T..Tp lane padding) becomes a
    # well-defined zero.  This replaces the old wrapper-side jnp.pad, which was
    # a full extra HBM round-trip of the activation.
    cols_ref[...] = jnp.zeros(cols_ref.shape, cols_ref.dtype)

    # im2col: cols[(tap, ci), n*Tp + t] = x[n, ci, tap_offset + t].
    for n in range(nb):                                    # NB is small & static
        xn = x_ref[n].astype(jnp.bfloat16)                 # one image; cast once
        col0 = n * t_pad
        for idx, off in enumerate(taps):                   # taps are static ints
            valid = min(t_len, hw - off)                   # last-row taps fall short
            cols_ref[idx * cin:(idx + 1) * cin, col0:col0 + valid] = (
                xn[:, off:off + valid])                    # in-register lane shift

    # One lane-dense, un-batched matmul for the whole batch block:
    # (Cout, Q) @ (Q, NB*Tp), bf16 inputs, f32 accumulation on the MXU.
    acc = jnp.dot(w_ref[...], cols_ref[...],
                  preferred_element_type=jnp.float32)      # (Cout, NB*Tp)

    if has_bias:
        acc = acc + b_ref[...]                             # (Cout, 1) broadcast
    if relu:
        acc = jnp.where(acc >= 0, acc, neg_slope * acc)    # leaky_relu(0.01)

    for n in range(nb):                                    # (Cout, Tp) full-tile,
        o_ref[n] = acc[:, n * t_pad:(n + 1) * t_pad].astype(o_ref.dtype)


def _round_up(x, m):
    return -(-x // m) * m


def _pick_batch_block(n, per_image_bytes):
    """>= 4 pipelined grid steps when the batch allows; per-step blocks <~4 MiB."""
    budget = max(1, (4 << 20) // max(per_image_bytes, 1))
    nb = max(1, min(n // 4, budget))
    while n % nb:
        nb -= 1
    return nb


def basic_conv2d(x_nchw, weight_oihw, *, bn_scale=None, bn_bias=None,
                 relu=True, negative_slope=0.01, batch_block=None):
    """BasicConv2d forward. stride=1, padding=0 (the nn.Conv2d defaults).

    x_nchw:      (N, Cin, H, W)
    weight_oihw: (Cout, Cin, KH, KW)
    bn_scale/bn_bias: optional per-channel (Cout,) folded eval-mode BN params
        (scale = gamma / sqrt(running_var + eps); bias = beta - mean * scale).
        None => bn disabled (identity), matching the module default.
    """
    N, Cin, H, W = x_nchw.shape
    Cout, Cin2, KH, KW = weight_oihw.shape
    assert Cin == Cin2, (Cin, Cin2)
    OH, OW = H - KH + 1, W - KW + 1
    HW = H * W
    T = OH * W                       # flattened output length (incl. junk cols/row)
    Tp = _round_up(T, 128)           # lane-dense (unmasked stores / MXU lanes)
    Q = KH * KW * Cin

    # Fold eval-mode BN scale into the weights (one-time, constant-foldable).
    w = weight_oihw
    if bn_scale is not None:
        w = w * bn_scale.reshape(Cout, 1, 1, 1)
    # (Cout, Cin, KH, KW) -> (Cout, KH, KW, Cin) -> (Cout, Q); bf16 for the MXU.
    w_q = jnp.transpose(w, (0, 2, 3, 1)).reshape(Cout, Q).astype(jnp.bfloat16)

    # NCHW kept end to end; flattening spatial dims is a metadata-only reshape
    # (no HBM copy, unlike the old jnp.pad).
    x_flat = x_nchw.reshape(N, Cin, HW)

    taps = tuple(ki * W + kj for ki in range(KH) for kj in range(KW))

    itemsize = jnp.dtype(x_nchw.dtype).itemsize
    per_image = Cin * HW * itemsize + Cout * Tp * itemsize + Q * Tp * 2
    NB = batch_block if batch_block is not None else _pick_batch_block(N, per_image)
    assert N % NB == 0, (N, NB)

    has_bias = bn_bias is not None
    inputs = [x_flat, w_q]
    in_specs = [
        pl.BlockSpec((NB, Cin, HW), lambda b: (b, 0, 0)),
        pl.BlockSpec((Cout, Q), lambda b: (0, 0)),
    ]
    if has_bias:
        inputs.append(bn_bias.reshape(Cout, 1).astype(jnp.float32))
        in_specs.append(pl.BlockSpec((Cout, 1), lambda b: (0, 0)))

    kernel = functools.partial(
        _conv_bn_lrelu_kernel, taps=taps, cin=Cin, hw=HW, t_len=T, t_pad=Tp,
        relu=relu, neg_slope=negative_slope, has_bias=has_bias)

    # VMEM budget from the real (tile-padded) block sizes: double-buffered
    # inputs/outputs + single-buffered scratch + margin; clamped to v7x's 64 MiB.
    sub = lambda isz: max(1, 32 // isz)          # sublane rows per tile for itemsize
    x_blk = NB * _round_up(Cin, sub(itemsize)) * _round_up(HW, 128) * itemsize
    w_blk = _round_up(Cout, 16) * _round_up(Q, 128) * 2
    b_blk = (_round_up(Cout, 8) * 128 * 4) if has_bias else 0
    o_blk = NB * _round_up(Cout, sub(itemsize)) * Tp * itemsize
    cols_blk = _round_up(Q, 16) * NB * Tp * 2
    vmem_limit = int(min(max(2 * (x_blk + w_blk + b_blk + o_blk) + cols_blk
                             + (4 << 20), 16 << 20), 64 << 20))

    out_flat = pl.pallas_call(
        kernel,
        out_shape=jax.ShapeDtypeStruct((N, Cout, Tp), x_nchw.dtype),
        grid_spec=pltpu.PrefetchScalarGridSpec(
            num_scalar_prefetch=0,
            grid=(N // NB,),
            in_specs=in_specs,
            out_specs=pl.BlockSpec((NB, Cout, Tp), lambda b: (b, 0, 0)),
            scratch_shapes=[pltpu.VMEM((Q, NB * Tp), jnp.bfloat16)],
        ),
        compiler_params=pltpu.CompilerParams(
            dimension_semantics=("parallel",),
            vmem_limit_bytes=vmem_limit),
    )(*inputs)

    # (N, Cout, Tp) -> valid NCHW: drop lane padding + row-wrap columns.
    # TODO(synk): fuse this slice into the consumer's BlockSpec when chained.
    return out_flat[:, :, :T].reshape(N, Cout, OH, W)[:, :, :, :OW]


if __name__ == "__main__":
    # Small shapes consistent with the module: N=2, Cin=4, Cout=8, 3x3, 16x16.
    N, Cin, Cout, K, H, W = 2, 4, 8, 3, 16, 16
    key = jax.random.PRNGKey(0)
    kx, kw_, ks, kb = jax.random.split(key, 4)

    x = jax.random.normal(kx, (N, Cin, H, W), jnp.float32)
    fan_in = Cin * K * K
    bound = 1.0 / jnp.sqrt(fan_in)
    weight = jax.random.uniform(kw_, (Cout, Cin, K, K), jnp.float32,
                                minval=-bound, maxval=bound)

    # The kernel multiplies bf16-rounded operands on the MXU with f32
    # accumulation, so compare against the conv of bf16-rounded inputs
    # (differences then come only from accumulation order).
    xq = x.astype(jnp.bfloat16).astype(jnp.float32)

    def conv_ref(wmat):
        wq = wmat.astype(jnp.bfloat16).astype(jnp.float32)
        return jax.lax.conv_general_dilated(
            xq, wq, window_strides=(1, 1), padding="VALID",
            dimension_numbers=("NCHW", "OIHW", "NCHW"))

    # --- bn=False (module default) -------------------------------------------
    out = basic_conv2d(x, weight, relu=True)
    out = jax.block_until_ready(out)
    ref = conv_ref(weight)
    ref = jnp.where(ref >= 0, ref, 0.01 * ref)
    assert out.shape == (N, Cout, H - K + 1, W - K + 1), out.shape
    max_err = float(jnp.max(jnp.abs(out - ref)))
    assert max_err < 1e-3, max_err

    # --- bn=True (eval-mode, folded scale + bias) -----------------------------
    scale = jax.random.uniform(ks, (Cout,), jnp.float32, minval=0.5, maxval=1.5)
    bias = 0.1 * jax.random.normal(kb, (Cout,), jnp.float32)
    out_bn = basic_conv2d(x, weight, bn_scale=scale, bn_bias=bias, relu=True)
    out_bn = jax.block_until_ready(out_bn)
    ref_bn = conv_ref(weight * scale.reshape(Cout, 1, 1, 1))
    ref_bn = ref_bn + bias.reshape(1, Cout, 1, 1)
    ref_bn = jnp.where(ref_bn >= 0, ref_bn, 0.01 * ref_bn)
    max_err_bn = float(jnp.max(jnp.abs(out_bn - ref_bn)))
    assert max_err_bn < 1e-3, max_err_bn

    print("KERNEL_OK")
</pallas_src>

<mosaic_0001>
module attributes {stable_mosaic.version = 11 : i64} {
  func.func @_conv_bn_lrelu_kernel(%arg0: i32, %arg1: memref<1x4x256xf32, #tpu.memory_space<vmem>>, %arg2: memref<8x36xbf16, #tpu.memory_space<vmem>>, %arg3: memref<1x8x256xf32, #tpu.memory_space<vmem>>, %arg4: memref<36x256xbf16, #tpu.memory_space<vmem>>) attributes {dimension_semantics = [#tpu.dimension_semantics<parallel>], iteration_bounds = array<i64: 2>, scalar_prefetch = 0 : i64, scratch_operands = 1 : i64, tpu.core_type = #tpu.core_type<tc>, window_params = [{transform_indices = @transform_0, window_bounds = array<i64: 1, 4, 256>}, {pipeline_mode = #tpu.pipeline_mode<synchronous>, transform_indices = @transform_1, window_bounds = array<i64: 8, 36>}, {transform_indices = @transform_2, window_bounds = array<i64: 1, 8, 256>}]} {
    %cst = arith.constant 0.000000e+00 : bf16
    %0 = vector.broadcast %cst : bf16 to vector<36x256xbf16>
    %c0 = arith.constant 0 : index
    %c0_0 = arith.constant 0 : index
    %1 = vector.load %arg4[%c0, %c0_0] : memref<36x256xbf16, #tpu.memory_space<vmem>>, vector<36x256xbf16>
    tpu.vector_store %arg4[%c0, %c0_0], %0 {strides = array<i32>} : memref<36x256xbf16, #tpu.memory_space<vmem>>, vector<36x256xbf16>,
    %c0_1 = arith.constant 0 : index
    %c0_2 = arith.constant 0 : index
    %c0_3 = arith.constant 0 : index
    %2 = vector.load %arg1[%c0_1, %c0_2, %c0_3] : memref<1x4x256xf32, #tpu.memory_space<vmem>>, vector<1x4x256xf32>
    %3 = vector.shape_cast %2 : vector<1x4x256xf32> to vector<4x256xf32>
    %4 = arith.truncf %3 : vector<4x256xf32> to vector<4x256xbf16>
    %5 = vector.extract_strided_slice %4 {offsets = [0, 0], sizes = [4, 224], strides = [1, 1]} : vector<4x256xbf16> to vector<4x224xbf16>
    %c0_4 = arith.constant 0 : index
    %c0_5 = arith.constant 0 : index
    %6 = vector.load %arg4[%c0_4, %c0_5] : memref<36x256xbf16, #tpu.memory_space<vmem>>, vector<4x224xbf16>
    tpu.vector_store %arg4[%c0_4, %c0_5], %5 {strides = array<i32>} : memref<36x256xbf16, #tpu.memory_space<vmem>>, vector<4x224xbf16>,
    %7 = vector.extract_strided_slice %4 {offsets = [0, 1], sizes = [4, 224], strides = [1, 1]} : vector<4x256xbf16> to vector<4x224xbf16>
    %c4 = arith.constant 4 : index
    %c0_6 = arith.constant 0 : index
    %8 = vector.load %arg4[%c4, %c0_6] : memref<36x256xbf16, #tpu.memory_space<vmem>>, vector<4x224xbf16>
    tpu.vector_store %arg4[%c4, %c0_6], %7 {strides = array<i32>} : memref<36x256xbf16, #tpu.memory_space<vmem>>, vector<4x224xbf16>,
    %9 = vector.extract_strided_slice %4 {offsets = [0, 2], sizes = [4, 224], strides = [1, 1]} : vector<4x256xbf16> to vector<4x224xbf16>
    %c8 = arith.constant 8 : index
    %c0_7 = arith.constant 0 : index
    %10 = vector.load %arg4[%c8, %c0_7] : memref<36x256xbf16, #tpu.memory_space<vmem>>, vector<4x224xbf16>
    tpu.vector_store %arg4[%c8, %c0_7], %9 {strides = array<i32>} : memref<36x256xbf16, #tpu.memory_space<vmem>>, vector<4x224xbf16>,
    %11 = vector.extract_strided_slice %4 {offsets = [0, 16], sizes = [4, 224], strides = [1, 1]} : vector<4x256xbf16> to vector<4x224xbf16>
    %c12 = arith.constant 12 : index
    %c0_8 = arith.constant 0 : index
    %12 = vector.load %arg4[%c12, %c0_8] : memref<36x256xbf16, #tpu.memory_space<vmem>>, vector<4x224xbf16>
    tpu.vector_store %arg4[%c12, %c0_8], %11 {strides = array<i32>} : memref<36x256xbf16, #tpu.memory_space<vmem>>, vector<4x224xbf16>,
    %13 = vector.extract_strided_slice %4 {offsets = [0, 17], sizes = [4, 224], strides = [1, 1]} : vector<4x256xbf16> to vector<4x224xbf16>
    %c16 = arith.constant 16 : index
    %c0_9 = arith.constant 0 : index
    %14 = vector.load %arg4[%c16, %c0_9] : memref<36x256xbf16, #tpu.memory_space<vmem>>, vector<4x224xbf16>
    tpu.vector_store %arg4[%c16, %c0_9], %13 {strides = array<i32>} : memref<36x256xbf16, #tpu.memory_space<vmem>>, vector<4x224xbf16>,
    %15 = vector.extract_strided_slice %4 {offsets = [0, 18], sizes = [4, 224], strides = [1, 1]} : vector<4x256xbf16> to vector<4x224xbf16>
    %c20 = arith.constant 20 : index
    %c0_10 = arith.constant 0 : index
    %16 = vector.load %arg4[%c20, %c0_10] : memref<36x256xbf16, #tpu.memory_space<vmem>>, vector<4x224xbf16>
    tpu.vector_store %arg4[%c20, %c0_10], %15 {strides = array<i32>} : memref<36x256xbf16, #tpu.memory_space<vmem>>, vector<4x224xbf16>,
    %17 = vector.extract_strided_slice %4 {offsets = [0, 32], sizes = [4, 224], strides = [1, 1]} : vector<4x256xbf16> to vector<4x224xbf16>
    %c24 = arith.constant 24 : index
    %c0_11 = arith.constant 0 : index
    %18 = vector.load %arg4[%c24, %c0_11] : memref<36x256xbf16, #tpu.memory_space<vmem>>, vector<4x224xbf16>
    tpu.vector_store %arg4[%c24, %c0_11], %17 {strides = array<i32>} : memref<36x256xbf16, #tpu.memory_space<vmem>>, vector<4x224xbf16>,
    %19 = vector.extract_strided_slice %4 {offsets = [0, 33], sizes = [4, 223], strides = [1, 1]} : vector<4x256xbf16> to vector<4x223xbf16>
    %c28 = arith.constant 28 : index
    %c0_12 = arith.constant 0 : index
    %20 = vector.load %arg4[%c28, %c0_12] : memref<36x256xbf16, #tpu.memory_space<vmem>>, vector<4x223xbf16>
    tpu.vector_store %arg4[%c28, %c0_12], %19 {strides = array<i32>} : memref<36x256xbf16, #tpu.memory_space<vmem>>, vector<4x223xbf16>,
    %21 = vector.extract_strided_slice %4 {offsets = [0, 34], sizes = [4, 222], strides = [1, 1]} : vector<4x256xbf16> to vector<4x222xbf16>
    %c32 = arith.constant 32 : index
    %c0_13 = arith.constant 0 : index
    %22 = vector.load %arg4[%c32, %c0_13] : memref<36x256xbf16, #tpu.memory_space<vmem>>, vector<4x222xbf16>
    tpu.vector_store %arg4[%c32, %c0_13], %21 {strides = array<i32>} : memref<36x256xbf16, #tpu.memory_space<vmem>>, vector<4x222xbf16>,
    %c0_14 = arith.constant 0 : index
    %c0_15 = arith.constant 0 : index
    %23 = vector.load %arg2[%c0_14, %c0_15] : memref<8x36xbf16, #tpu.memory_space<vmem>>, vector<8x36xbf16>
    %c0_16 = arith.constant 0 : index
    %c0_17 = arith.constant 0 : index
    %24 = vector.load %arg4[%c0_16, %c0_17] : memref<36x256xbf16, #tpu.memory_space<vmem>>, vector<36x256xbf16>
    %cst_18 = arith.constant dense<0.000000e+00> : vector<8x256xf32>
    %25 = tpu.matmul %23, %24, %cst_18 {dimension_numbers = #tpu.dot_dimension_numbers<[1], [0], [0], [1], [0, 0, 1, 1], [], []>} : vector<8x36xbf16>, vector<36x256xbf16>, vector<8x256xf32> -> vector<8x256xf32>
    %cst_19 = arith.constant 0.000000e+00 : f32
    %26 = vector.broadcast %cst_19 : f32 to vector<8x256xf32>
    %27 = arith.cmpf oge, %25, %26 : vector<8x256xf32>
    %cst_20 = arith.constant 0.00999999977 : f32
    %28 = vector.broadcast %cst_20 : f32 to vector<8x256xf32>
    %29 = arith.mulf %28, %25 : vector<8x256xf32>
    %30 = arith.select %27, %25, %29 : vector<8x256xi1>, vector<8x256xf32>
    %c0_21 = arith.constant 0 : index
    %c0_22 = arith.constant 0 : index
    %c0_23 = arith.constant 0 : index
    %31 = vector.load %arg3[%c0_21, %c0_22, %c0_23] : memref<1x8x256xf32, #tpu.memory_space<vmem>>, vector<1x8x256xf32>
    %32 = vector.shape_cast %31 : vector<1x8x256xf32> to vector<8x256xf32>
    %33 = vector.shape_cast %30 : vector<8x256xf32> to vector<1x8x256xf32>
    tpu.vector_store %arg3[%c0_21, %c0_22, %c0_23], %33 {strides = array<i32>} : memref<1x8x256xf32, #tpu.memory_space<vmem>>, vector<1x8x256xf32>,
    return
  }
  func.func @transform_0(%arg0: i32) -> (i32, i32, i32) {
    %c0_i32 = arith.constant 0 : i32
    %c0_i32_0 = arith.constant 0 : i32
    %c0_i32_1 = arith.constant 0 : i32
    return %arg0, %c0_i32, %c0_i32_0 : i32, i32, i32
  }
  func.func @transform_1(%arg0: i32) -> (i32, i32) {
    %c0_i32 = arith.constant 0 : i32
    %c0_i32_0 = arith.constant 0 : i32
    %c0_i32_1 = arith.constant 0 : i32
    return %c0_i32, %c0_i32_0 : i32, i32
  }
  func.func @transform_2(%arg0: i32) -> (i32, i32, i32) {
    %c0_i32 = arith.constant 0 : i32
    %c0_i32_0 = arith.constant 0 : i32
    %c0_i32_1 = arith.constant 0 : i32
    return %arg0, %c0_i32, %c0_i32_0 : i32, i32, i32
  }
}

</mosaic_0001>

<llo_original>
// kernel: tpu_custom_call.1
$region0: #{tpu_custom_call.1}
  #allocation0 [shape = 'u32[]', space=smem, size = 0x4, offset = 0x4, fixed_abs, tag = 'smem constant byte address 0x4 - core index']
  #allocation1 [shape = 'u32[72,128]{1,0:T(1,128)}', space=vmem, size = 0x9000, scoped, tag = 'internal scratch']
  #allocation2 [shape = 'bf16[36,256]{1,0:T(8,128)(2,1)}', space=vmem, size = 0x5000, scoped, tag = 'scratch operand']
  %s0 = inlined_call_operand.hbm [shape: f32[2,4,256], index: 0, kind: input, shape index: {}]
  %s1 = inlined_call_operand.hbm [shape: bf16[8,36], index: 1, kind: input, shape index: {}]
  %s2 = inlined_call_operand.hbm [shape: f32[2,8,256], index: 2, kind: output, shape index: {}]
  %s3 = sld [smem:[#allocation0]]
  $region49: #{tpu_custom_call.1} parent=0
    _
  %s5 = ssub.s32 1, %s3
  %s6 = scalar_select 0, %s5, %s3
  $region1: #{tpu_custom_call.1} parent=0
    #allocation3 [shape = 'u8[8192]{0}', space=vmem, size = 0x2000, scoped, tag = 'input window, operand 0']
    #allocation4 [shape = 's32[2]{0}', space=sflag, size = 0x8, scoped, tag = 'scoped memory for tpu_custom_call.1']
    #allocation5 [shape = 's32[2]{0}', space=sflag, size = 0x8, scoped, tag = 'scoped memory for tpu_custom_call.1']
    #allocation6 [shape = 'u8[2048]{0}', space=vmem, size = 0x800, scoped, tag = 'input window, operand 1, single buffered']
    #allocation7 [shape = 's32[1]{0}', space=sflag, size = 0x4, scoped, tag = 'scoped memory for tpu_custom_call.1']
    #allocation8 [shape = 'u8[16384]{0}', space=vmem, size = 0x4000, scoped, tag = 'output window, operand 0']
    %7 = vsyncpa [#allocation4], 0
    %s8 = scalar_lea.sflag [#allocation4], 1
    %9 = vsyncpa %s8, 0
    %10 = vsyncpa [#allocation7], 0
    %11 = vsyncpa [#allocation5], 0
    %s12 = scalar_lea.sflag [#allocation5], 1
    %13 = vsyncpa %s12, 0
    loop: start=0, step=1, limit=4
    $region2: #{tpu_custom_call.1} parent=1 // loop_pre_header
      _
    $region3: #{tpu_custom_call.1} parent=1 // loop_header
      %s15 = sphi 0, %s19
      %p16 = scmp.ge.s32.totalorder %s15, 4
      %s25 = sphi 0, %s27
      %s28 = sphi 0, %s25
      %s29 = sphi 0, %s28
      %s45 = sphi 0, %s29
      %s49 = sphi 0, %s49
      %s51 = sphi 0, %s49
      %s52 = sphi 0, %s51
      %s66 = sphi 0, %s52
      %s72 = sphi 0, %s74
      %s75 = sphi 0, %s72
      %s76 = sphi 0, %s75
      %s92 = sphi 0, %s76
    $region4: #{tpu_custom_call.1} parent=1 // loop_header_branch
      %18 = sbr.rel (%p16) target = $region8
    $region5: #{tpu_custom_call.1} parent=1 // loop_body
      %s20 = ssub.s32 %s15, 1
      %s21 = ssub.s32 %s15, 2
      %s22 = sadd.s32 %s15, 1
      %s23 = ssub.s32 %s15, %s22
      %p24 = scmp.eq.s32.totalorder %s23, 0
      %s26 = sadd.s32 %s25, 1
      %s27 = scalar_select %p24, %s25, %s26
      %p30 = pneg %p24
      %p31 = scmp.eq.s32.totalorder %s15, 1
      %p32 = por %p30, %p31
      %p33 = scmp.ne.s32.totalorder %s25, %s28
      %p34 = scmp.eq.s32.totalorder %s15, 0
      %p35 = por %p33, %p34
      %p36 = scmp.ne.s32.totalorder %s25, %s28
      %p37 = scmp.eq.s32.totalorder %s20, 1
      %p38 = por %p36, %p37
      %p39 = scmp.ne.s32.totalorder %s28, %s29
      %p40 = scmp.eq.s32.totalorder %s20, 0
      %p41 = por %p39, %p40
      %p42 = scmp.ne.s32.totalorder %s28, %s29
      %p43 = scmp.eq.s32.totalorder %s21, 1
      %p44 = por %p42, %p43
      %p46 = scmp.ne.s32.totalorder %s29, %s45
      %p47 = scmp.eq.s32.totalorder %s21, 0
      %p48 = por %p46, %p47
      %s50 = sadd.s32 %s49, 1
      %p53 = scmp.eq.s32.totalorder %s15, 1
      %p54 = scmp.ne.s32.totalorder %s49, %s51
      %p55 = scmp.eq.s32.totalorder %s15, 0
      %p56 = por %p54, %p55
      %p57 = scmp.ne.s32.totalorder %s49, %s51
      %p58 = scmp.eq.s32.totalorder %s20, 1
      %p59 = por %p57, %p58
      %p60 = scmp.ne.s32.totalorder %s51, %s52
      %p61 = scmp.eq.s32.totalorder %s20, 0
      %p62 = por %p60, %p61
      %p63 = scmp.ne.s32.totalorder %s51, %s52
      %p64 = scmp.eq.s32.totalorder %s21, 1
      %p65 = por %p63, %p64
      %p67 = scmp.ne.s32.totalorder %s52, %s66
      %p68 = scmp.eq.s32.totalorder %s21, 0
      %p69 = por %p67, %p68
      %s70 = ssub.s32 %s15, %s22
      %p71 = scmp.eq.s32.totalorder %s70, 0
      %s73 = sadd.s32 %s72, 1
      %s74 = scalar_select %p71, %s72, %s73
      %p77 = pneg %p71
      %p78 = scmp.eq.s32.totalorder %s15, 1
      %p79 = por %p77, %p78
      %p80 = scmp.ne.s32.totalorder %s72, %s75
      %p81 = scmp.eq.s32.totalorder %s15, 0
      %p82 = por %p80, %p81
      %p83 = scmp.ne.s32.totalorder %s72, %s75
      %p84 = scmp.eq.s32.totalorder %s20, 1
      %p85 = por %p83, %p84
      %p86 = scmp.ne.s32.totalorder %s75, %s76
      %p87 = scmp.eq.s32.totalorder %s20, 0
      %p88 = por %p86, %p87
      %p89 = scmp.ne.s32.totalorder %s75, %s76
      %p90 = scmp.eq.s32.totalorder %s21, 1
      %p91 = por %p89, %p90
      %p93 = scmp.ne.s32.totalorder %s76, %s92
      %p94 = scmp.eq.s32.totalorder %s21, 0
      %p95 = por %p93, %p94
      %p96 = scmp.le.s32.totalorder 1, %s15
      %p97 = scmp.lt.s32.totalorder %s15, 3
      %p98 = pnand %p96, %p97
      %p99 = pneg %p98
      // Predicated region
      $region9: #{tpu_custom_call.1} parent=5 // pred_check
        _
      $region10: #{tpu_custom_call.1} parent=5 // pred_check_branch
        %101 = sbr.rel (%p98) target = $region12
      $region11: #{tpu_custom_call.1} parent=5 // pred_region
        %s102 = ssub.s32 %s15, 1
        // Predicated region
        $region13: #{tpu_custom_call.1} parent=11 // pred_check
          %p103 = pneg %p62
        $region14: #{tpu_custom_call.1} parent=11 // pred_check_branch
          %105 = sbr.rel (%p103) target = $region16
        $region15: #{tpu_custom_call.1} parent=11 // pred_region
          %107 = vsyncadd [#allocation7], 0
          %s109 = sshll.u32 %s1, 4
          %s110 = int_to_ptr.hbm [resolvable:$true] %s109
          %s111 = sshll.u32 [#allocation6], 4
          %s112 = int_to_ptr.vmem [resolvable:$true] %s111
          %114 = dma.hbm_to_vmem [thread:$0]  %s110, 64, %s112, [#allocation7]
        $region16: #{tpu_custom_call.1} parent=11 // pred_fallthru
          _
      $region12: #{tpu_custom_call.1} parent=5 // pred_fallthru
        _
      %p115 = scmp.lt.s32.totalorder %s15, 2
      // Predicated region
      $region17: #{tpu_custom_call.1} parent=5 // pred_check
        %p116 = pneg %p115
      $region18: #{tpu_custom_call.1} parent=5 // pred_check_branch
        %118 = sbr.rel (%p116) target = $region20
      $region19: #{tpu_custom_call.1} parent=5 // pred_region
        // Predicated region
        $region21: #{tpu_custom_call.1} parent=19 // pred_check
          %p119 = pneg %p35
        $region22: #{tpu_custom_call.1} parent=19 // pred_check_branch
          %121 = sbr.rel (%p119) target = $region24
        $region23: #{tpu_custom_call.1} parent=19 // pred_region
          %s122 = sand.u32 %s25, 1
          %s123 = scalar_lea.sflag [#allocation4], %s122
          %s124 = sand.u32 %s25, 1
          %s125 = smul.addr %s124, 8
          %s126 = scalar_lea.vmem [#allocation3], %s125
          %128 = vsyncadd %s123, 0
          %s129 = smul.addr %s15, 2
          %s130 = smul.addr %s129, 4
          %s131 = scalar_lea.hbm %s0, %s130
          %s133 = sshll.u32 %s131, 4
          %s134 = int_to_ptr.hbm [resolvable:$true] %s133
          %s135 = sshll.u32 %s126, 4
          %s136 = int_to_ptr.vmem [resolvable:$true] %s135
          %138 = dma.hbm_to_vmem [thread:$0]  %s134, 128, %s136, %s123
        $region24: #{tpu_custom_call.1} parent=19 // pred_fallthru
          _
      $region20: #{tpu_custom_call.1} parent=5 // pred_fallthru
        _
      %p139 = scmp.le.s32.totalorder 1, %s15
      %p140 = scmp.lt.s32.totalorder %s15, 3
      %p141 = pnand %p139, %p140
      %p142 = pneg %p141
      // Predicated region
      $region25: #{tpu_custom_call.1} parent=5 // pred_check
        _
      $region26: #{tpu_custom_call.1} parent=5 // pred_check_branch
        %144 = sbr.rel (%p141) target = $region28
      $region27: #{tpu_custom_call.1} parent=5 // pred_region
        %s145 = ssub.s32 %s15, 1
        %s146 = sand.u32 %s28, 1
        %s147 = scalar_lea.sflag [#allocation4], %s146
        %s148 = sand.u32 %s28, 1
        %s149 = smul.addr %s148, 8
        %s150 = scalar_lea.vmem [#allocation3], %s149
        // Predicated region
        $region29: #{tpu_custom_call.1} parent=27 // pred_check
          %p151 = pneg %p41
        $region30: #{tpu_custom_call.1} parent=27 // pred_check_branch
          %153 = sbr.rel (%p151) target = $region32
        $region31: #{tpu_custom_call.1} parent=27 // pred_region
          %155 = dma.done %s147, 128
        $region32: #{tpu_custom_call.1} parent=27 // pred_fallthru
          _
        // Predicated region
        $region33: #{tpu_custom_call.1} parent=27 // pred_check
          %p156 = pneg %p62
        $region34: #{tpu_custom_call.1} parent=27 // pred_check_branch
          %158 = sbr.rel (%p156) target = $region36
        $region35: #{tpu_custom_call.1} parent=27 // pred_region
          %160 = dma.done [#allocation7], 64
        $region36: #{tpu_custom_call.1} parent=27 // pred_fallthru
          _
        %s161 = sand.u32 %s28, 1
        %s162 = scalar_lea.sflag [#allocation4], %s161
        %s163 = sand.u32 %s28, 1
        %s164 = smul.addr %s163, 8
        %s165 = scalar_lea.vmem [#allocation3], %s164
        %p166 = pneg %p41
        %p167 = pneg %p38
        %p168 = pneg %p62
        %p169 = pneg %p59
        %p170 = pneg %p88
        %p171 = pneg %p85
        %s172 = sand.u32 %s75, 1
        %s173 = scalar_lea.sflag [#allocation5], %s172
        %s174 = sand.u32 %s75, 1
        %s175 = smul.addr %s174, 16
        %s176 = scalar_lea.vmem [#allocation8], %s175
        %178 = vst [vmem:[#allocation2] sm:$0xff] 0
        %179 = vst [vmem:[#allocation2 + $0x8] sm:$0xff] 0
        %180 = vst [vmem:[#allocation2 + $0x10] sm:$0xff] 0
        %181 = vst [vmem:[#allocation2 + $0x18] sm:$0xff] 0
        %182 = vst [vmem:[#allocation2 + $0x20] sm:$0x33] 0
        %v183 = vld [vmem:[%s150] sm:$0xff]
        %185 = vst [vmem:[#allocation1] ss:$2 sm:$0xff] %v183
        %v186 = vld.sshfl [vmem:[#allocation1] sm:$0xff pattern:$0x75316420]
        %v187 = vld.sshfl [vmem:[#allocation1 + $0x8] sm:$0xff pattern:$0x75316420]
        %v190 = vpack.c.bf16 %v187, %v186
        %vm191 = vcmask 1041408
        %vm192 = vcmask 783364
        %vm193 = vmor %vm192, %vm191
        %194 = vst.msk [vmem:[#allocation2] sm:$0x33] %vm193, %v190
        %v196 = vrot.slane %v190, 6
        %197 = vrot.lane.b32.xlu0 %v196, 127
        %v198 = vpop.permute.xlu0 %197
        %v199 = vrot.slane %v198, 4
        %vm200 = vcmask 1039360
        %v201 = vsel %vm200, %v198, %v199
        %vm203 = vcmask 1043458
        %vm204 = vcmask 785414
        %vm205 = vmor %vm204, %vm203
        %206 = vst.msk [vmem:[#allocation2] sm:$0xcc] %vm205, %v201
        %207 = vrot.lane.b32.xlu0 %v190, 126
        %v208 = vpop.permute.xlu0 %207
        %v209 = vrot.slane %v208, 4
        %vm210 = vcmask 1031168
        %v211 = vsel %vm210, %v208, %v209
        %213 = vst.msk [vmem:[#allocation2 + $0x8] sm:$0x33] %vm193, %v211
        %214 = vrot.lane.b32.xlu0 %v196, 112
        %v215 = vpop.permute.xlu0 %214
        %v216 = vrot.slane %v215, 4
        %vm217 = vcmask 916480
        %v218 = vsel %vm217, %v215, %v216
        %220 = vst.msk [vmem:[#allocation2 + $0x8] sm:$0xcc] %vm205, %v218
        %221 = vrot.lane.b32.xlu0 %v190, 111
        %v222 = vpop.permute.xlu0 %221
        %v223 = vrot.slane %v222, 4
        %vm224 = vcmask 908288
        %v225 = vsel %vm224, %v222, %v223
        %227 = vst.msk [vmem:[#allocation2 + $0x10] sm:$0x33] %vm193, %v225
        %228 = vrot.lane.b32.xlu0 %v196, 110
        %v229 = vpop.permute.xlu0 %228
        %v230 = vrot.slane %v229, 4
        %vm231 = vcmask 900096
        %v232 = vsel %vm231, %v229, %v230
        %234 = vst.msk [vmem:[#allocation2 + $0x10] sm:$0xcc] %vm205, %v232
        %235 = vrot.lane.b32.xlu0 %v190, 96
        %v236 = vpop.permute.xlu0 %235
        %v237 = vrot.slane %v236, 4
        %vm238 = vcmask 785408
        %v239 = vsel %vm238, %v236, %v237
        %241 = vst.msk [vmem:[#allocation2 + $0x18] sm:$0x33] %vm193, %v239
        %242 = vrot.lane.b32.xlu0 %v196, 95
        %v243 = vpop.permute.xlu0 %242
        %v244 = vrot.slane %v243, 4
        %vm245 = vcmask 777216
        %v246 = vsel %vm245, %v243, %v244
        %vm248 = vcmask 777222
        %vm249 = vmor %vm248, %vm203
        %250 = vst.msk [vmem:[#allocation2 + $0x18] sm:$0xcc] %vm249, %v246
        %251 = vrot.lane.b32.xlu0 %v190, 94
        %v252 = vpop.permute.xlu0 %251
        %v253 = vrot.slane %v252, 4
        %vm254 = vcmask 769024
        %v255 = vsel %vm254, %v252, %v253
        %vm257 = vcmask 766980
        %vm258 = vmor %vm257, %vm191
        %259 = vst.msk [vmem:[#allocation2 + $0x20] sm:$0x33] %vm258, %v255
        %v260 = vld [vmem:[#allocation6] sm:$0xf]
        %v261 = vld [vmem:[#allocation2] sm:$0xff]
        %v262 = vld [vmem:[#allocation2 + $0x8] sm:$0xff]
        %v263 = vld [vmem:[#allocation2 + $0x10] sm:$0xff]
        %v264 = vld [vmem:[#allocation2 + $0x18] sm:$0xff]
        %v265 = vld [vmem:[#allocation2 + $0x20] sm:$0x33]
        %v271 = vunpack.c.l.b16 %v261
        %v272 = vunpack.c.h.b16 %v261
        %v273 = vunpack.c.l.b16 %v262
        %v274 = vunpack.c.h.b16 %v262
        %v275 = vunpack.c.l.b16 %v263
        %v276 = vunpack.c.h.b16 %v263
        %v277 = vunpack.c.l.b16 %v264
        %v278 = vunpack.c.h.b16 %v264
        %v279 = vunpack.c.l.b16 %v265
        %v280 = vunpack.c.h.b16 %v265
        %v281 = vpack.c.b16 %v273, %v271
        %v282 = vpack.c.b16 %v274, %v272
        %v283 = vpack.c.b16 %v277, %v275
        %v284 = vpack.c.b16 %v278, %v276
        %v285 = vpack.c.b16 %v279, %v279
        %v286 = vpack.c.b16 %v280, %v280
        %vm291 = vcmask 293888
        %v293 = vsel %vm291, %v260, 0
        %v296 = vsel %vm191, %v285, 0
        %v299 = vsel %vm191, %v286, 0
        %301 = vmatpush.bf16.msra.mxu0 0
        %302 = vmatpush.bf16.msra.mxu0 0
        %303 = vmatpush.bf16.msra.mxu0 0
        %304 = vmatpush.bf16.msra.mxu0 0
        %305 = vmatpush.bf16.msra.mxu0 0
        %306 = vmatpush.bf16.msra.mxu0 %v296
        %307 = vmatpush.bf16.msra.mxu0 %v283
        %308 = vmatpush.bf16.msra.mxu0 %v281
        %309 = vmatmul.bf16.gmra.mxu0 %v293
        %v310 = vpop.f32.mrf.mxu0
        %v311 = vadd.f32 0.0, %v310
        %v312 = vpop.f32.mrf.mxu0
        %313 = vdwg.mxu0
        %314 = vmatpush.bf16.msra.mxu0 0
        %315 = vmatpush.bf16.msra.mxu0 0
        %316 = vmatpush.bf16.msra.mxu0 0
        %317 = vmatpush.bf16.msra.mxu0 0
        %318 = vmatpush.bf16.msra.mxu0 0
        %319 = vmatpush.bf16.msra.mxu0 %v299
        %320 = vmatpush.bf16.msra.mxu0 %v284
        %321 = vmatpush.bf16.msra.mxu0 %v282
        %322 = vmatmul.bf16.gmra.mxu0 %v293
        %v323 = vpop.f32.mrf.mxu0
        %v324 = vadd.f32 0.0, %v323
        %v325 = vpop.f32.mrf.mxu0
        %326 = vdwg.mxu0
        %vm327 = vcmp.ge.f32.partialorder %v311, 0.0
        %vm328 = vcmp.ge.f32.partialorder %v324, 0.0
        %v329 = vmul.f32 %v311, 0.01
        %v330 = vmul.f32 %v324, 0.01
        %v331 = vsel %vm327, %v311, %v329
        %v332 = vsel %vm328, %v324, %v330
        %333 = vst [vmem:[%s176] sm:$0xff] %v331
        %334 = vst [vmem:[%s176 + $0x8] sm:$0xff] %v332
        %s335 = sand.u32 %s75, 1
        %s336 = scalar_lea.sflag [#allocation5], %s335
        %s337 = sand.u32 %s75, 1
        %s338 = smul.addr %s337, 16
        %s339 = scalar_lea.vmem [#allocation8], %s338
        // Predicated region
        $region37: #{tpu_custom_call.1} parent=27 // pred_check
          %p340 = pneg %p85
        $region38: #{tpu_custom_call.1} parent=27 // pred_check_branch
          %342 = sbr.rel (%p340) target = $region40
        $region39: #{tpu_custom_call.1} parent=27 // pred_region
          %344 = vsyncadd %s336, 0
          %s345 = smul.addr %s20, 2
          %s346 = smul.addr %s345, 8
          %s347 = scalar_lea.hbm %s2, %s346
          %s349 = sshll.u32 %s339, 4
          %s350 = int_to_ptr.vmem [resolvable:$true] %s349
          %s351 = sshll.u32 %s347, 4
          %s352 = int_to_ptr.hbm [resolvable:$true] %s351
          %354 = dma.vmem_to_hbm [thread:$0]  %s350, 256, %s352, %s336
        $region40: #{tpu_custom_call.1} parent=27 // pred_fallthru
          _
      $region28: #{tpu_custom_call.1} parent=5 // pred_fallthru
        _
      %p355 = scmp.le.s32.totalorder 2, %s15
      // Predicated region
      $region41: #{tpu_custom_call.1} parent=5 // pred_check
        %p356 = pneg %p355
      $region42: #{tpu_custom_call.1} parent=5 // pred_check_branch
        %358 = sbr.rel (%p356) target = $region44
      $region43: #{tpu_custom_call.1} parent=5 // pred_region
        %s359 = ssub.s32 %s15, 2
        // Predicated region
        $region45: #{tpu_custom_call.1} parent=43 // pred_check
          %p360 = pneg %p91
        $region46: #{tpu_custom_call.1} parent=43 // pred_check_branch
          %362 = sbr.rel (%p360) target = $region48
        $region47: #{tpu_custom_call.1} parent=43 // pred_region
          %s363 = sand.u32 %s76, 1
          %s364 = scalar_lea.sflag [#allocation5], %s363
          %s365 = sand.u32 %s76, 1
          %s366 = smul.addr %s365, 16
          %s367 = scalar_lea.vmem [#allocation8], %s366
          %369 = dma.done %s364, 256
        $region48: #{tpu_custom_call.1} parent=43 // pred_fallthru
          _
      $region44: #{tpu_custom_call.1} parent=5 // pred_fallthru
        _
    $region6: #{tpu_custom_call.1} parent=1 // loop_footer
      %s19 = sadd.s32 1, %s15
    $region7: #{tpu_custom_call.1} parent=1 // loop_footer_branch
      %14 = sbr.rel target = $region3
    $region8: #{tpu_custom_call.1} parent=1 // loop_exit
      _
    %370 = vsyncpa [#allocation4], 1
    %s371 = scalar_lea.sflag [#allocation4], 1
    %372 = vsyncpa %s371, 1
    %373 = vsyncpa [#allocation7], 1
    %374 = vsyncpa [#allocation5], 1
    %s375 = scalar_lea.sflag [#allocation5], 1
    %376 = vsyncpa %s375, 1

</llo_original>
